<compile_context>
chip_gen: v5e
topology: v5e:2x2
jax: 0.10.0
libtpu: 0.0.40
codegen_flags: <defaults>
</compile_context>

<pallas_src>
import functools

import jax
import jax.numpy as jnp
from jax.experimental import pallas as pl
from jax.experimental.pallas import tpu as pltpu


def mlp_kernel(x_ref,
               w1_ref, b1_ref,
               w2_ref, b2_ref,
               w3_ref, b3_ref,
               w4_ref, b4_ref,
               w5_ref, b5_ref,
               out_ref):
    h = x_ref[...]
    # Hidden layers 1..4: Linear + Tanh (MXU matmul -> f32 acc, EUP tanh).
    for w_ref, b_ref in ((w1_ref, b1_ref), (w2_ref, b2_ref),
                         (w3_ref, b3_ref), (w4_ref, b4_ref)):
        h = jnp.tanh(
            jnp.dot(h.astype(w_ref.dtype), w_ref[...],
                    preferred_element_type=jnp.float32)
            + b_ref[...])
    # Output layer: Linear (no activation), lane-dense padded store.
    out_ref[...] = (
        jnp.dot(h.astype(w5_ref.dtype), w5_ref[...],
                preferred_element_type=jnp.float32)
        + b5_ref[...]).astype(out_ref.dtype)


def _round_up(n, m):
    return ((n + m - 1) // m) * m


def _pad2(a, rows, cols):
    return jnp.pad(a, ((0, rows - a.shape[0]), (0, cols - a.shape[1])))


def net_forward(x, params, *, tile_b=256, weight_dtype=jnp.float32):
    """Fused MLP forward pass as a single batch-tiled Pallas kernel."""
    (w1, b1), (w2, b2), (w3, b3), (w4, b4), (w5, b5) = params
    batch, input_dim = x.shape
    n_units = w1.shape[1]
    output_dim = w5.shape[1]

    # Lane-dense padded feature dims (multiples of 128).
    in_p = _round_up(input_dim, 128)
    hid_p = _round_up(n_units, 128)
    out_p = _round_up(output_dim, 128)

    # Batch tiling: multiples of 8 sublanes; don't over-pad tiny batches.
    tile_b = max(8, min(int(tile_b), _round_up(batch, 8)))
    batch_p = _round_up(batch, tile_b)
    num_tiles = batch_p // tile_b

    # Zero-pad inputs / params (exact: padded lanes never contribute).
    xp = _pad2(x.astype(jnp.float32), batch_p, in_p)
    w1p = _pad2(w1, in_p, hid_p).astype(weight_dtype)
    w2p = _pad2(w2, hid_p, hid_p).astype(weight_dtype)
    w3p = _pad2(w3, hid_p, hid_p).astype(weight_dtype)
    w4p = _pad2(w4, hid_p, hid_p).astype(weight_dtype)
    w5p = _pad2(w5, hid_p, out_p).astype(weight_dtype)
    b1p = _pad2(b1, 1, hid_p).astype(jnp.float32)
    b2p = _pad2(b2, 1, hid_p).astype(jnp.float32)
    b3p = _pad2(b3, 1, hid_p).astype(jnp.float32)
    b4p = _pad2(b4, 1, hid_p).astype(jnp.float32)
    b5p = _pad2(b5, 1, out_p).astype(jnp.float32)

    # x / out: tiled over the batch grid.  Weights / biases: full-array blocks
    # with constant index_maps so they stay VMEM-resident across tiles.
    x_spec = pl.BlockSpec((tile_b, in_p), lambda i: (i, 0))
    const = lambda i: (0, 0)
    w_specs = [
        pl.BlockSpec((in_p, hid_p), const), pl.BlockSpec((1, hid_p), const),
        pl.BlockSpec((hid_p, hid_p), const), pl.BlockSpec((1, hid_p), const),
        pl.BlockSpec((hid_p, hid_p), const), pl.BlockSpec((1, hid_p), const),
        pl.BlockSpec((hid_p, hid_p), const), pl.BlockSpec((1, hid_p), const),
        pl.BlockSpec((hid_p, out_p), const), pl.BlockSpec((1, out_p), const),
    ]
    out_spec = pl.BlockSpec((tile_b, out_p), lambda i: (i, 0))

    # Advisory cost hint for the XLA scheduler.
    flops = 2 * batch_p * (in_p * hid_p + 3 * hid_p * hid_p + hid_p * out_p)
    wbytes = 4 * (in_p * hid_p + 3 * hid_p * hid_p + hid_p * out_p
                  + 4 * hid_p + out_p)
    cost = pl.CostEstimate(
        flops=flops,
        transcendentals=4 * batch_p * hid_p,
        bytes_accessed=4 * batch_p * (in_p + out_p) + wbytes,
    )

    out_padded = pl.pallas_call(
        mlp_kernel,
        out_shape=jax.ShapeDtypeStruct((batch_p, out_p), jnp.float32),
        grid=(num_tiles,),
        in_specs=[x_spec] + w_specs,
        out_specs=out_spec,
        cost_estimate=cost,
        compiler_params=pltpu.CompilerParams(
            # Batch axis is independent -> shard across TCs on v7x megacore.
            dimension_semantics=("parallel",),
        ),
    )(xp, w1p, b1p, w2p, b2p, w3p, b3p, w4p, b4p, w5p, b5p)

    return out_padded[:batch, :output_dim]


def init_linear(key, fan_in, fan_out):
    """PyTorch nn.Linear-style uniform(-1/sqrt(fan_in), 1/sqrt(fan_in)) init."""
    kw, kb = jax.random.split(key)
    bound = 1.0 / jnp.sqrt(jnp.float32(fan_in))
    # Stored as (in, out) so the kernel does x @ W  (== x @ W_pt.T).
    w = jax.random.uniform(kw, (fan_in, fan_out), jnp.float32, -bound, bound)
    b = jax.random.uniform(kb, (1, fan_out), jnp.float32, -bound, bound)
    return w, b


def init_net_params(key, input_dim, output_dim, n_units):
    keys = jax.random.split(key, 5)
    return (init_linear(keys[0], input_dim, n_units),
            init_linear(keys[1], n_units, n_units),
            init_linear(keys[2], n_units, n_units),
            init_linear(keys[3], n_units, n_units),
            init_linear(keys[4], n_units, output_dim))


# TODO(synk): Net.fit / nderv / predict are host-side Adam-training /
# autograd-physics-loss code, not part of the forward pass; only forward()
# is implemented as a kernel.

if __name__ == "__main__":
    # Small shapes consistent with Net(input_dim, output_dim, n_units).
    batch = 8
    input_dim = 4
    output_dim = 2
    n_units = 32

    root = jax.random.PRNGKey(0)
    kx, kp = jax.random.split(root)

    x = jax.random.normal(kx, (batch, input_dim), jnp.float32)
    params = init_net_params(kp, input_dim, output_dim, n_units)

    fwd = jax.jit(functools.partial(net_forward, tile_b=256,
                                    weight_dtype=jnp.float32))
    out = jax.block_until_ready(fwd(x, params))

    # Plain-JAX reference (same math, unpadded).
    h = x
    for (w, b) in params[:4]:
        h = jnp.tanh(h @ w + b)
    ref = h @ params[4][0] + params[4][1]

    assert out.shape == (batch, output_dim)
    assert jnp.allclose(out, ref, atol=1e-5, rtol=1e-5)

    print("KERNEL_OK")
</pallas_src>

<mosaic_0001>
module attributes {stable_mosaic.version = 11 : i64} {
  func.func @mlp_kernel(%arg0: i32, %arg1: memref<8x128xf32, #tpu.memory_space<vmem>>, %arg2: memref<128x128xf32, #tpu.memory_space<vmem>>, %arg3: memref<1x128xf32, #tpu.memory_space<vmem>>, %arg4: memref<128x128xf32, #tpu.memory_space<vmem>>, %arg5: memref<1x128xf32, #tpu.memory_space<vmem>>, %arg6: memref<128x128xf32, #tpu.memory_space<vmem>>, %arg7: memref<1x128xf32, #tpu.memory_space<vmem>>, %arg8: memref<128x128xf32, #tpu.memory_space<vmem>>, %arg9: memref<1x128xf32, #tpu.memory_space<vmem>>, %arg10: memref<128x128xf32, #tpu.memory_space<vmem>>, %arg11: memref<1x128xf32, #tpu.memory_space<vmem>>, %arg12: memref<8x128xf32, #tpu.memory_space<vmem>>) attributes {dimension_semantics = [#tpu.dimension_semantics<parallel>], iteration_bounds = array<i64: 1>, scalar_prefetch = 0 : i64, scratch_operands = 0 : i64, tpu.core_type = #tpu.core_type<tc>, window_params = [{transform_indices = @transform_0, window_bounds = array<i64: 8, 128>}, {pipeline_mode = #tpu.pipeline_mode<synchronous>, transform_indices = @transform_1, window_bounds = array<i64: 128, 128>}, {pipeline_mode = #tpu.pipeline_mode<synchronous>, transform_indices = @transform_2, window_bounds = array<i64: 1, 128>}, {pipeline_mode = #tpu.pipeline_mode<synchronous>, transform_indices = @transform_3, window_bounds = array<i64: 128, 128>}, {pipeline_mode = #tpu.pipeline_mode<synchronous>, transform_indices = @transform_4, window_bounds = array<i64: 1, 128>}, {pipeline_mode = #tpu.pipeline_mode<synchronous>, transform_indices = @transform_5, window_bounds = array<i64: 128, 128>}, {pipeline_mode = #tpu.pipeline_mode<synchronous>, transform_indices = @transform_6, window_bounds = array<i64: 1, 128>}, {pipeline_mode = #tpu.pipeline_mode<synchronous>, transform_indices = @transform_7, window_bounds = array<i64: 128, 128>}, {pipeline_mode = #tpu.pipeline_mode<synchronous>, transform_indices = @transform_8, window_bounds = array<i64: 1, 128>}, {pipeline_mode = #tpu.pipeline_mode<synchronous>, transform_indices = @transform_9, window_bounds = array<i64: 128, 128>}, {pipeline_mode = #tpu.pipeline_mode<synchronous>, transform_indices = @transform_10, window_bounds = array<i64: 1, 128>}, {transform_indices = @transform_11, window_bounds = array<i64: 8, 128>}]} {
    %c0 = arith.constant 0 : index
    %c0_0 = arith.constant 0 : index
    %0 = vector.load %arg1[%c0, %c0_0] : memref<8x128xf32, #tpu.memory_space<vmem>>, vector<8x128xf32>
    %c0_1 = arith.constant 0 : index
    %c0_2 = arith.constant 0 : index
    %1 = vector.load %arg2[%c0_1, %c0_2] : memref<128x128xf32, #tpu.memory_space<vmem>>, vector<128x128xf32>
    %cst = arith.constant dense<0.000000e+00> : vector<8x128xf32>
    %2 = tpu.matmul %0, %1, %cst {dimension_numbers = #tpu.dot_dimension_numbers<[1], [0], [0], [1], [0, 0, 1, 1], [], []>} : vector<8x128xf32>, vector<128x128xf32>, vector<8x128xf32> -> vector<8x128xf32>
    %c0_3 = arith.constant 0 : index
    %c0_4 = arith.constant 0 : index
    %3 = vector.load %arg3[%c0_3, %c0_4] : memref<1x128xf32, #tpu.memory_space<vmem>>, vector<1x128xf32>
    %4 = vector.broadcast %3 : vector<1x128xf32> to vector<8x128xf32>
    %5 = arith.addf %2, %4 : vector<8x128xf32>
    %6 = math.tanh %5 : vector<8x128xf32>
    %c0_5 = arith.constant 0 : index
    %c0_6 = arith.constant 0 : index
    %7 = vector.load %arg4[%c0_5, %c0_6] : memref<128x128xf32, #tpu.memory_space<vmem>>, vector<128x128xf32>
    %cst_7 = arith.constant dense<0.000000e+00> : vector<8x128xf32>
    %8 = tpu.matmul %6, %7, %cst_7 {dimension_numbers = #tpu.dot_dimension_numbers<[1], [0], [0], [1], [0, 0, 1, 1], [], []>} : vector<8x128xf32>, vector<128x128xf32>, vector<8x128xf32> -> vector<8x128xf32>
    %c0_8 = arith.constant 0 : index
    %c0_9 = arith.constant 0 : index
    %9 = vector.load %arg5[%c0_8, %c0_9] : memref<1x128xf32, #tpu.memory_space<vmem>>, vector<1x128xf32>
    %10 = vector.broadcast %9 : vector<1x128xf32> to vector<8x128xf32>
    %11 = arith.addf %8, %10 : vector<8x128xf32>
    %12 = math.tanh %11 : vector<8x128xf32>
    %c0_10 = arith.constant 0 : index
    %c0_11 = arith.constant 0 : index
    %13 = vector.load %arg6[%c0_10, %c0_11] : memref<128x128xf32, #tpu.memory_space<vmem>>, vector<128x128xf32>
    %cst_12 = arith.constant dense<0.000000e+00> : vector<8x128xf32>
    %14 = tpu.matmul %12, %13, %cst_12 {dimension_numbers = #tpu.dot_dimension_numbers<[1], [0], [0], [1], [0, 0, 1, 1], [], []>} : vector<8x128xf32>, vector<128x128xf32>, vector<8x128xf32> -> vector<8x128xf32>
    %c0_13 = arith.constant 0 : index
    %c0_14 = arith.constant 0 : index
    %15 = vector.load %arg7[%c0_13, %c0_14] : memref<1x128xf32, #tpu.memory_space<vmem>>, vector<1x128xf32>
    %16 = vector.broadcast %15 : vector<1x128xf32> to vector<8x128xf32>
    %17 = arith.addf %14, %16 : vector<8x128xf32>
    %18 = math.tanh %17 : vector<8x128xf32>
    %c0_15 = arith.constant 0 : index
    %c0_16 = arith.constant 0 : index
    %19 = vector.load %arg8[%c0_15, %c0_16] : memref<128x128xf32, #tpu.memory_space<vmem>>, vector<128x128xf32>
    %cst_17 = arith.constant dense<0.000000e+00> : vector<8x128xf32>
    %20 = tpu.matmul %18, %19, %cst_17 {dimension_numbers = #tpu.dot_dimension_numbers<[1], [0], [0], [1], [0, 0, 1, 1], [], []>} : vector<8x128xf32>, vector<128x128xf32>, vector<8x128xf32> -> vector<8x128xf32>
    %c0_18 = arith.constant 0 : index
    %c0_19 = arith.constant 0 : index
    %21 = vector.load %arg9[%c0_18, %c0_19] : memref<1x128xf32, #tpu.memory_space<vmem>>, vector<1x128xf32>
    %22 = vector.broadcast %21 : vector<1x128xf32> to vector<8x128xf32>
    %23 = arith.addf %20, %22 : vector<8x128xf32>
    %24 = math.tanh %23 : vector<8x128xf32>
    %c0_20 = arith.constant 0 : index
    %c0_21 = arith.constant 0 : index
    %25 = vector.load %arg10[%c0_20, %c0_21] : memref<128x128xf32, #tpu.memory_space<vmem>>, vector<128x128xf32>
    %cst_22 = arith.constant dense<0.000000e+00> : vector<8x128xf32>
    %26 = tpu.matmul %24, %25, %cst_22 {dimension_numbers = #tpu.dot_dimension_numbers<[1], [0], [0], [1], [0, 0, 1, 1], [], []>} : vector<8x128xf32>, vector<128x128xf32>, vector<8x128xf32> -> vector<8x128xf32>
    %c0_23 = arith.constant 0 : index
    %c0_24 = arith.constant 0 : index
    %27 = vector.load %arg11[%c0_23, %c0_24] : memref<1x128xf32, #tpu.memory_space<vmem>>, vector<1x128xf32>
    %28 = vector.broadcast %27 : vector<1x128xf32> to vector<8x128xf32>
    %29 = arith.addf %26, %28 : vector<8x128xf32>
    %c0_25 = arith.constant 0 : index
    %c0_26 = arith.constant 0 : index
    %30 = vector.load %arg12[%c0_25, %c0_26] : memref<8x128xf32, #tpu.memory_space<vmem>>, vector<8x128xf32>
    tpu.vector_store %arg12[%c0_25, %c0_26], %29 {strides = array<i32>} : memref<8x128xf32, #tpu.memory_space<vmem>>, vector<8x128xf32>,
    return
  }
  func.func @transform_0(%arg0: i32) -> (i32, i32) {
    %c0_i32 = arith.constant 0 : i32
    %c0_i32_0 = arith.constant 0 : i32
    return %arg0, %c0_i32 : i32, i32
  }
  func.func @transform_1(%arg0: i32) -> (i32, i32) {
    %c0_i32 = arith.constant 0 : i32
    %c0_i32_0 = arith.constant 0 : i32
    %c0_i32_1 = arith.constant 0 : i32
    return %c0_i32, %c0_i32_0 : i32, i32
  }
  func.func @transform_2(%arg0: i32) -> (i32, i32) {
    %c0_i32 = arith.constant 0 : i32
    %c0_i32_0 = arith.constant 0 : i32
    %c0_i32_1 = arith.constant 0 : i32
    return %c0_i32, %c0_i32_0 : i32, i32
  }
  func.func @transform_3(%arg0: i32) -> (i32, i32) {
    %c0_i32 = arith.constant 0 : i32
    %c0_i32_0 = arith.constant 0 : i32
    %c0_i32_1 = arith.constant 0 : i32
    return %c0_i32, %c0_i32_0 : i32, i32
  }
  func.func @transform_4(%arg0: i32) -> (i32, i32) {
    %c0_i32 = arith.constant 0 : i32
    %c0_i32_0 = arith.constant 0 : i32
    %c0_i32_1 = arith.constant 0 : i32
    return %c0_i32, %c0_i32_0 : i32, i32
  }
  func.func @transform_5(%arg0: i32) -> (i32, i32) {
    %c0_i32 = arith.constant 0 : i32
    %c0_i32_0 = arith.constant 0 : i32
    %c0_i32_1 = arith.constant 0 : i32
    return %c0_i32, %c0_i32_0 : i32, i32
  }
  func.func @transform_6(%arg0: i32) -> (i32, i32) {
    %c0_i32 = arith.constant 0 : i32
    %c0_i32_0 = arith.constant 0 : i32
    %c0_i32_1 = arith.constant 0 : i32
    return %c0_i32, %c0_i32_0 : i32, i32
  }
  func.func @transform_7(%arg0: i32) -> (i32, i32) {
    %c0_i32 = arith.constant 0 : i32
    %c0_i32_0 = arith.constant 0 : i32
    %c0_i32_1 = arith.constant 0 : i32
    return %c0_i32, %c0_i32_0 : i32, i32
  }
  func.func @transform_8(%arg0: i32) -> (i32, i32) {
    %c0_i32 = arith.constant 0 : i32
    %c0_i32_0 = arith.constant 0 : i32
    %c0_i32_1 = arith.constant 0 : i32
    return %c0_i32, %c0_i32_0 : i32, i32
  }
  func.func @transform_9(%arg0: i32) -> (i32, i32) {
    %c0_i32 = arith.constant 0 : i32
    %c0_i32_0 = arith.constant 0 : i32
    %c0_i32_1 = arith.constant 0 : i32
    return %c0_i32, %c0_i32_0 : i32, i32
  }
  func.func @transform_10(%arg0: i32) -> (i32, i32) {
    %c0_i32 = arith.constant 0 : i32
    %c0_i32_0 = arith.constant 0 : i32
    %c0_i32_1 = arith.constant 0 : i32
    return %c0_i32, %c0_i32_0 : i32, i32
  }
  func.func @transform_11(%arg0: i32) -> (i32, i32) {
    %c0_i32 = arith.constant 0 : i32
    %c0_i32_0 = arith.constant 0 : i32
    return %arg0, %c0_i32 : i32, i32
  }
}

</mosaic_0001>

<llo_original>
// kernel: net_forward.1
$region0: #{net_forward.1}
  #allocation0 [shape = 'u32[]', space=smem, size = 0x4, offset = 0x4, fixed_abs, tag = 'smem constant byte address 0x4 - core index']
  #allocation1 [shape = 'u32[72,128]{1,0:T(1,128)}', space=vmem, size = 0x9000, scoped, tag = 'internal scratch']
  %s0 = inlined_call_operand.vmem [shape: f32[8,128], index: 0, kind: input, shape index: {}]
  %s1 = inlined_call_operand.vmem [shape: f32[128,128], index: 1, kind: input, shape index: {}]
  %s2 = inlined_call_operand.vmem [shape: f32[1,128], index: 2, kind: input, shape index: {}]
  %s3 = inlined_call_operand.vmem [shape: f32[128,128], index: 3, kind: input, shape index: {}]
  %s4 = inlined_call_operand.vmem [shape: f32[1,128], index: 4, kind: input, shape index: {}]
  %s5 = inlined_call_operand.vmem [shape: f32[128,128], index: 5, kind: input, shape index: {}]
  %s6 = inlined_call_operand.vmem [shape: f32[1,128], index: 6, kind: input, shape index: {}]
  %s7 = inlined_call_operand.vmem [shape: f32[128,128], index: 7, kind: input, shape index: {}]
  %s8 = inlined_call_operand.vmem [shape: f32[1,128], index: 8, kind: input, shape index: {}]
  %s9 = inlined_call_operand.vmem [shape: f32[128,128], index: 9, kind: input, shape index: {}]
  %s10 = inlined_call_operand.vmem [shape: f32[1,128], index: 10, kind: input, shape index: {}]
  %s11 = inlined_call_operand.vmem [shape: f32[8,128], index: 11, kind: output, shape index: {}]
  %s12 = sld [smem:[#allocation0]]
  $region54: #{net_forward.1} parent=0
    _
  %s14 = ssub.s32 1, %s12
  %s15 = scalar_select 0, %s14, %s12
  // Predicated region
  $region2: #{net_forward.1} parent=0 // pred_check
    _
  $region3: #{net_forward.1} parent=0 // pred_check_branch
    %17 = sbr.rel (0) target = $region5
  $region4: #{net_forward.1} parent=0 // pred_region
    _
  $region5: #{net_forward.1} parent=0 // pred_fallthru
    _
  // Predicated region
  $region6: #{net_forward.1} parent=0 // pred_check
    _
  $region7: #{net_forward.1} parent=0 // pred_check_branch
    %19 = sbr.rel (0) target = $region9
  $region8: #{net_forward.1} parent=0 // pred_region
    _
  $region9: #{net_forward.1} parent=0 // pred_fallthru
    _
  // Predicated region
  $region10: #{net_forward.1} parent=0 // pred_check
    _
  $region11: #{net_forward.1} parent=0 // pred_check_branch
    %21 = sbr.rel (0) target = $region13
  $region12: #{net_forward.1} parent=0 // pred_region
    _
  $region13: #{net_forward.1} parent=0 // pred_fallthru
    _
  // Predicated region
  $region14: #{net_forward.1} parent=0 // pred_check
    _
  $region15: #{net_forward.1} parent=0 // pred_check_branch
    %23 = sbr.rel (0) target = $region17
  $region16: #{net_forward.1} parent=0 // pred_region
    _
  $region17: #{net_forward.1} parent=0 // pred_fallthru
    _
  // Predicated region
  $region18: #{net_forward.1} parent=0 // pred_check
    _
  $region19: #{net_forward.1} parent=0 // pred_check_branch
    %25 = sbr.rel (0) target = $region21
  $region20: #{net_forward.1} parent=0 // pred_region
    _
  $region21: #{net_forward.1} parent=0 // pred_fallthru
    _
  // Predicated region
  $region22: #{net_forward.1} parent=0 // pred_check
    _
  $region23: #{net_forward.1} parent=0 // pred_check_branch
    %27 = sbr.rel (0) target = $region25
  $region24: #{net_forward.1} parent=0 // pred_region
    _
  $region25: #{net_forward.1} parent=0 // pred_fallthru
    _
  // Predicated region
  $region26: #{net_forward.1} parent=0 // pred_check
    _
  $region27: #{net_forward.1} parent=0 // pred_check_branch
    %29 = sbr.rel (0) target = $region29
  $region28: #{net_forward.1} parent=0 // pred_region
    _
  $region29: #{net_forward.1} parent=0 // pred_fallthru
    _
  // Predicated region
  $region30: #{net_forward.1} parent=0 // pred_check
    _
  $region31: #{net_forward.1} parent=0 // pred_check_branch
    %31 = sbr.rel (0) target = $region33
  $region32: #{net_forward.1} parent=0 // pred_region
    _
  $region33: #{net_forward.1} parent=0 // pred_fallthru
    _
  // Predicated region
  $region34: #{net_forward.1} parent=0 // pred_check
    _
  $region35: #{net_forward.1} parent=0 // pred_check_branch
    %33 = sbr.rel (0) target = $region37
  $region36: #{net_forward.1} parent=0 // pred_region
    _
  $region37: #{net_forward.1} parent=0 // pred_fallthru
    _
  // Predicated region
  $region38: #{net_forward.1} parent=0 // pred_check
    _
  $region39: #{net_forward.1} parent=0 // pred_check_branch
    %35 = sbr.rel (0) target = $region41
  $region40: #{net_forward.1} parent=0 // pred_region
    _
  $region41: #{net_forward.1} parent=0 // pred_fallthru
    _
  // Predicated region
  $region42: #{net_forward.1} parent=0 // pred_check
    _
  $region43: #{net_forward.1} parent=0 // pred_check_branch
    %37 = sbr.rel (0) target = $region45
  $region44: #{net_forward.1} parent=0 // pred_region
    _
  $region45: #{net_forward.1} parent=0 // pred_fallthru
    _
  %v38 = vld [vmem:[%s0] sm:$0xff]
  %v39 = vld [vmem:[%s1] sm:$0xff]
  %v40 = vld [vmem:[%s1 + $0x8] sm:$0xff]
  %v41 = vld [vmem:[%s1 + $0x10] sm:$0xff]
  %v42 = vld [vmem:[%s1 + $0x18] sm:$0xff]
  %v43 = vld [vmem:[%s1 + $0x20] sm:$0xff]
  %v44 = vld [vmem:[%s1 + $0x28] sm:$0xff]
  %v45 = vld [vmem:[%s1 + $0x30] sm:$0xff]
  %v46 = vld [vmem:[%s1 + $0x38] sm:$0xff]
  %v47 = vld [vmem:[%s1 + $0x40] sm:$0xff]
  %v48 = vld [vmem:[%s1 + $0x48] sm:$0xff]
  %v49 = vld [vmem:[%s1 + $0x50] sm:$0xff]
  %v50 = vld [vmem:[%s1 + $0x58] sm:$0xff]
  %v51 = vld [vmem:[%s1 + $0x60] sm:$0xff]
  %v52 = vld [vmem:[%s1 + $0x68] sm:$0xff]
  %v53 = vld [vmem:[%s1 + $0x70] sm:$0xff]
  %v54 = vld [vmem:[%s1 + $0x78] sm:$0xff]
  %v55 = vld [vmem:[%s2] sm:$0x1]
  %v57 = vperm.slane %v55, 0
  %59 = vmatpush.msra.mxu0 %v54
  %60 = vmatpush.msra.mxu0 %v53
  %61 = vmatpush.msra.mxu0 %v52
  %62 = vmatpush.msra.mxu0 %v51
  %63 = vmatpush.msra.mxu0 %v50
  %64 = vmatpush.msra.mxu0 %v49
  %65 = vmatpush.msra.mxu0 %v48
  %66 = vmatpush.msra.mxu0 %v47
  %67 = vmatpush.msra.mxu0 %v46
  %68 = vmatpush.msra.mxu0 %v45
  %69 = vmatpush.msra.mxu0 %v44
  %70 = vmatpush.msra.mxu0 %v43
  %71 = vmatpush.msra.mxu0 %v42
  %72 = vmatpush.msra.mxu0 %v41
  %73 = vmatpush.msra.mxu0 %v40
  %74 = vmatpush.msra.mxu0 %v39
  %75 = vmatmul.f32.gmra.mxu0 %v38
  %v76 = vpop.f32.mrf.mxu0
  %v77 = vadd.f32 %v57, %v76
  %78 = vdwg.mxu0
  %v79 = vtanh.pop %v77
  %v80 = vld [vmem:[%s3] sm:$0xff]
  %v81 = vld [vmem:[%s3 + $0x8] sm:$0xff]
  %v82 = vld [vmem:[%s3 + $0x10] sm:$0xff]
  %v83 = vld [vmem:[%s3 + $0x18] sm:$0xff]
  %v84 = vld [vmem:[%s3 + $0x20] sm:$0xff]
  %v85 = vld [vmem:[%s3 + $0x28] sm:$0xff]
  %v86 = vld [vmem:[%s3 + $0x30] sm:$0xff]
  %v87 = vld [vmem:[%s3 + $0x38] sm:$0xff]
  %v88 = vld [vmem:[%s3 + $0x40] sm:$0xff]
  %v89 = vld [vmem:[%s3 + $0x48] sm:$0xff]
  %v90 = vld [vmem:[%s3 + $0x50] sm:$0xff]
  %v91 = vld [vmem:[%s3 + $0x58] sm:$0xff]
  %v92 = vld [vmem:[%s3 + $0x60] sm:$0xff]
  %v93 = vld [vmem:[%s3 + $0x68] sm:$0xff]
  %v94 = vld [vmem:[%s3 + $0x70] sm:$0xff]
  %v95 = vld [vmem:[%s3 + $0x78] sm:$0xff]
  %v96 = vld [vmem:[%s4] sm:$0x1]
  %v98 = vperm.slane %v96, 0
  %100 = vmatpush.msra.mxu0 %v95
  %101 = vmatpush.msra.mxu0 %v94
  %102 = vmatpush.msra.mxu0 %v93
  %103 = vmatpush.msra.mxu0 %v92
  %104 = vmatpush.msra.mxu0 %v91
  %105 = vmatpush.msra.mxu0 %v90
  %106 = vmatpush.msra.mxu0 %v89
  %107 = vmatpush.msra.mxu0 %v88
  %108 = vmatpush.msra.mxu0 %v87
  %109 = vmatpush.msra.mxu0 %v86
  %110 = vmatpush.msra.mxu0 %v85
  %111 = vmatpush.msra.mxu0 %v84
  %112 = vmatpush.msra.mxu0 %v83
  %113 = vmatpush.msra.mxu0 %v82
  %114 = vmatpush.msra.mxu0 %v81
  %115 = vmatpush.msra.mxu0 %v80
  %116 = vmatmul.f32.gmra.mxu0 %v79
  %v117 = vpop.f32.mrf.mxu0
  %v118 = vadd.f32 %v98, %v117
  %119 = vdwg.mxu0
  %v120 = vtanh.pop %v118
  %v121 = vld [vmem:[%s5] sm:$0xff]
  %v122 = vld [vmem:[%s5 + $0x8] sm:$0xff]
  %v123 = vld [vmem:[%s5 + $0x10] sm:$0xff]
  %v124 = vld [vmem:[%s5 + $0x18] sm:$0xff]
  %v125 = vld [vmem:[%s5 + $0x20] sm:$0xff]
  %v126 = vld [vmem:[%s5 + $0x28] sm:$0xff]
  %v127 = vld [vmem:[%s5 + $0x30] sm:$0xff]
  %v128 = vld [vmem:[%s5 + $0x38] sm:$0xff]
  %v129 = vld [vmem:[%s5 + $0x40] sm:$0xff]
  %v130 = vld [vmem:[%s5 + $0x48] sm:$0xff]
  %v131 = vld [vmem:[%s5 + $0x50] sm:$0xff]
  %v132 = vld [vmem:[%s5 + $0x58] sm:$0xff]
  %v133 = vld [vmem:[%s5 + $0x60] sm:$0xff]
  %v134 = vld [vmem:[%s5 + $0x68] sm:$0xff]
  %v135 = vld [vmem:[%s5 + $0x70] sm:$0xff]
  %v136 = vld [vmem:[%s5 + $0x78] sm:$0xff]
  %v137 = vld [vmem:[%s6] sm:$0x1]
  %v139 = vperm.slane %v137, 0
  %141 = vmatpush.msra.mxu0 %v136
  %142 = vmatpush.msra.mxu0 %v135
  %143 = vmatpush.msra.mxu0 %v134
  %144 = vmatpush.msra.mxu0 %v133
  %145 = vmatpush.msra.mxu0 %v132
  %146 = vmatpush.msra.mxu0 %v131
  %147 = vmatpush.msra.mxu0 %v130
  %148 = vmatpush.msra.mxu0 %v129
  %149 = vmatpush.msra.mxu0 %v128
  %150 = vmatpush.msra.mxu0 %v127
  %151 = vmatpush.msra.mxu0 %v126
  %152 = vmatpush.msra.mxu0 %v125
  %153 = vmatpush.msra.mxu0 %v124
  %154 = vmatpush.msra.mxu0 %v123
  %155 = vmatpush.msra.mxu0 %v122
  %156 = vmatpush.msra.mxu0 %v121
  %157 = vmatmul.f32.gmra.mxu0 %v120
  %v158 = vpop.f32.mrf.mxu0
  %v159 = vadd.f32 %v139, %v158
  %160 = vdwg.mxu0
  %v161 = vtanh.pop %v159
  %v162 = vld [vmem:[%s7] sm:$0xff]
  %v163 = vld [vmem:[%s7 + $0x8] sm:$0xff]
  %v164 = vld [vmem:[%s7 + $0x10] sm:$0xff]
  %v165 = vld [vmem:[%s7 + $0x18] sm:$0xff]
  %v166 = vld [vmem:[%s7 + $0x20] sm:$0xff]
  %v167 = vld [vmem:[%s7 + $0x28] sm:$0xff]
  %v168 = vld [vmem:[%s7 + $0x30] sm:$0xff]
  %v169 = vld [vmem:[%s7 + $0x38] sm:$0xff]
  %v170 = vld [vmem:[%s7 + $0x40] sm:$0xff]
  %v171 = vld [vmem:[%s7 + $0x48] sm:$0xff]
  %v172 = vld [vmem:[%s7 + $0x50] sm:$0xff]
  %v173 = vld [vmem:[%s7 + $0x58] sm:$0xff]
  %v174 = vld [vmem:[%s7 + $0x60] sm:$0xff]
  %v175 = vld [vmem:[%s7 + $0x68] sm:$0xff]
  %v176 = vld [vmem:[%s7 + $0x70] sm:$0xff]
  %v177 = vld [vmem:[%s7 + $0x78] sm:$0xff]
  %v178 = vld [vmem:[%s8] sm:$0x1]
  %v180 = vperm.slane %v178, 0
  %182 = vmatpush.msra.mxu0 %v177
  %183 = vmatpush.msra.mxu0 %v176
  %184 = vmatpush.msra.mxu0 %v175
  %185 = vmatpush.msra.mxu0 %v174
  %186 = vmatpush.msra.mxu0 %v173
  %187 = vmatpush.msra.mxu0 %v172
  %188 = vmatpush.msra.mxu0 %v171
  %189 = vmatpush.msra.mxu0 %v170
  %190 = vmatpush.msra.mxu0 %v169
  %191 = vmatpush.msra.mxu0 %v168
  %192 = vmatpush.msra.mxu0 %v167
  %193 = vmatpush.msra.mxu0 %v166
  %194 = vmatpush.msra.mxu0 %v165
  %195 = vmatpush.msra.mxu0 %v164
  %196 = vmatpush.msra.mxu0 %v163
  %197 = vmatpush.msra.mxu0 %v162
  %198 = vmatmul.f32.gmra.mxu0 %v161
  %v199 = vpop.f32.mrf.mxu0
  %v200 = vadd.f32 %v180, %v199
  %201 = vdwg.mxu0
  %v202 = vtanh.pop %v200
  %v203 = vld [vmem:[%s9] sm:$0xff]
  %v204 = vld [vmem:[%s9 + $0x8] sm:$0xff]
  %v205 = vld [vmem:[%s9 + $0x10] sm:$0xff]
  %v206 = vld [vmem:[%s9 + $0x18] sm:$0xff]
  %v207 = vld [vmem:[%s9 + $0x20] sm:$0xff]
  %v208 = vld [vmem:[%s9 + $0x28] sm:$0xff]
  %v209 = vld [vmem:[%s9 + $0x30] sm:$0xff]
  %v210 = vld [vmem:[%s9 + $0x38] sm:$0xff]
  %v211 = vld [vmem:[%s9 + $0x40] sm:$0xff]
  %v212 = vld [vmem:[%s9 + $0x48] sm:$0xff]
  %v213 = vld [vmem:[%s9 + $0x50] sm:$0xff]
  %v214 = vld [vmem:[%s9 + $0x58] sm:$0xff]
  %v215 = vld [vmem:[%s9 + $0x60] sm:$0xff]
  %v216 = vld [vmem:[%s9 + $0x68] sm:$0xff]
  %v217 = vld [vmem:[%s9 + $0x70] sm:$0xff]
  %v218 = vld [vmem:[%s9 + $0x78] sm:$0xff]
  %v219 = vld [vmem:[%s10] sm:$0x1]
  %v221 = vperm.slane %v219, 0
  %223 = vmatpush.msra.mxu0 %v218
  %224 = vmatpush.msra.mxu0 %v217
  %225 = vmatpush.msra.mxu0 %v216
  %226 = vmatpush.msra.mxu0 %v215
  %227 = vmatpush.msra.mxu0 %v214
  %228 = vmatpush.msra.mxu0 %v213
  %229 = vmatpush.msra.mxu0 %v212
  %230 = vmatpush.msra.mxu0 %v211
  %231 = vmatpush.msra.mxu0 %v210
  %232 = vmatpush.msra.mxu0 %v209
  %233 = vmatpush.msra.mxu0 %v208
  %234 = vmatpush.msra.mxu0 %v207
  %235 = vmatpush.msra.mxu0 %v206
  %236 = vmatpush.msra.mxu0 %v205
  %237 = vmatpush.msra.mxu0 %v204
  %238 = vmatpush.msra.mxu0 %v203
  %239 = vmatmul.f32.gmra.mxu0 %v202
  %v240 = vpop.f32.mrf.mxu0
  %v241 = vadd.f32 %v221, %v240
  %242 = vdwg.mxu0
  %243 = vst [vmem:[%s11] sm:$0xff] %v241
  // Predicated region
  $region46: #{net_forward.1} parent=0 // pred_check
    _
  $region47: #{net_forward.1} parent=0 // pred_check_branch
    %245 = sbr.rel (0) target = $region49
  $region48: #{net_forward.1} parent=0 // pred_region
    _
  $region49: #{net_forward.1} parent=0 // pred_fallthru
    _
  // Predicated region
  $region50: #{net_forward.1} parent=0 // pred_check
    _
  $region51: #{net_forward.1} parent=0 // pred_check_branch
    %247 = sbr.rel (0) target = $region53
  $region52: #{net_forward.1} parent=0 // pred_region
    _
  $region53: #{net_forward.1} parent=0 // pred_fallthru
    _

</llo_original>
